<compile_context>
chip_gen: v7x
topology: tpu7x:2x2x1
jax: 0.10.0
libtpu: 0.0.40
codegen_flags: <defaults>
</compile_context>

<pallas_src>
import jax
import jax.numpy as jnp
from jax import lax
from jax.experimental import pallas as pl
from jax.experimental.pallas import tpu as pltpu

SUBSTEPS = 4  # RK4 substeps per interval of the supplied time grid


# ---------------------------------------------------------------------------
# Fused kernel: fitness (step 0) + RK4 time integration (steps 1..T-1)
# ---------------------------------------------------------------------------
def _cnode2_extfit_kernel(t_ref, gate_ref, x0_ref, w1t_ref, b1_ref,
                          w2t_ref, b2_ref, y_ref, x_sc, fx_sc):
    i = pl.program_id(0)
    gate = gate_ref[0]                                    # scalar (hoisted, SMEM)

    @pl.when(i == 0)
    def _init():
        x0 = x0_ref[...].astype(jnp.float32)              # [B, N]
        h1 = jnp.dot(x0, w1t_ref[...],
                     preferred_element_type=jnp.float32) + b1_ref[...]
        fx = jnp.dot(h1, w2t_ref[...],
                     preferred_element_type=jnp.float32) + b2_ref[...]
        fx_sc[...] = fx                                   # external fitness, fixed
        x_sc[...] = x0                                    # carried ODE state
        y_ref[0] = x0.astype(y_ref.dtype)                 # y[0] = x0

    @pl.when(i > 0)
    def _integrate():
        fx = fx_sc[...]                                   # [B, N] resident
        t0 = t_ref[i - 1]
        t1 = t_ref[i]
        h = (t1 - t0) / SUBSTEPS

        def deriv(x):
            xT_fx = jnp.sum(x * fx, axis=-1, keepdims=True)    # [B, 1]
            return gate * (x * (fx - xT_fx))                   # [B, N]

        def rk4_step(_, xc):
            k1 = deriv(xc)
            k2 = deriv(xc + (0.5 * h) * k1)
            k3 = deriv(xc + (0.5 * h) * k2)
            k4 = deriv(xc + h * k3)
            return xc + (h / 6.0) * (k1 + 2.0 * k2 + 2.0 * k3 + k4)

        x_new = lax.fori_loop(0, SUBSTEPS, rk4_step, x_sc[...], unroll=True)
        x_sc[...] = x_new
        y_ref[0] = x_new.astype(y_ref.dtype)              # y[i] = state at t[i]


def cnode2_external_fitness_pallas(t, x0, w1_t, b1_row, w2_t, b2_row, gate):
    """t: [T] f32, x0: [B, N] f32, w*_t: [N, N] f32 (= W.T), b*_row: [1, N] f32,
    gate: [1] f32.  Returns the trajectory [T, B, N]."""
    T = t.shape[0]
    B, N = x0.shape
    return pl.pallas_call(
        _cnode2_extfit_kernel,
        out_shape=jax.ShapeDtypeStruct((T, B, N), x0.dtype),
        grid=(T,),
        in_specs=[
            pl.BlockSpec(memory_space=pltpu.MemorySpace.SMEM),   # t     [T]
            pl.BlockSpec(memory_space=pltpu.MemorySpace.SMEM),   # gate  [1]
            pl.BlockSpec((B, N), lambda i: (0, 0)),              # x0     (resident)
            pl.BlockSpec((N, N), lambda i: (0, 0)),              # W1.T   (resident)
            pl.BlockSpec((1, N), lambda i: (0, 0)),              # b1 row (resident)
            pl.BlockSpec((N, N), lambda i: (0, 0)),              # W2.T   (resident)
            pl.BlockSpec((1, N), lambda i: (0, 0)),              # b2 row (resident)
        ],
        out_specs=pl.BlockSpec((1, B, N), lambda i: (i, 0, 0)),  # y[i] per step
        scratch_shapes=[pltpu.VMEM((B, N), jnp.float32),         # current state x
                        pltpu.VMEM((B, N), jnp.float32)],        # external fitness fx
        compiler_params=pltpu.CompilerParams(
            dimension_semantics=("arbitrary",)),                 # time is sequential
    )(t, gate, x0, w1_t, b1_row, w2_t, b2_row)


# ---------------------------------------------------------------------------
# Module wrapper (parameters initialized like torch.nn.Linear, deterministically)
# ---------------------------------------------------------------------------
def make_cnode2_external_fitness(N, bias=True, identity_gate=False, seed=0):
    key = jax.random.PRNGKey(seed)
    k1w, k1b, k2w, k2b = jax.random.split(key, 4)
    bound = 1.0 / float(N) ** 0.5
    W1 = jax.random.uniform(k1w, (N, N), jnp.float32, -bound, bound)
    W2 = jax.random.uniform(k2w, (N, N), jnp.float32, -bound, bound)
    if bias:
        b1 = jax.random.uniform(k1b, (N,), jnp.float32, -bound, bound)
        b2 = jax.random.uniform(k2b, (N,), jnp.float32, -bound, bound)
    else:
        b1 = jnp.zeros((N,), jnp.float32)
        b2 = jnp.zeros((N,), jnp.float32)
    # identity_gate=True -> learnable gate init 0.0 ; else buffer 1.0
    gate = jnp.array([0.0 if identity_gate else 1.0], dtype=jnp.float32)

    w1_t, w2_t = W1.T, W2.T                 # pre-transpose for plain x @ W.T on MXU
    b1_row, b2_row = b1.reshape(1, N), b2.reshape(1, N)
    params = (w1_t, b1_row, w2_t, b2_row, gate)

    @jax.jit
    def forward(t, x):
        return cnode2_external_fitness_pallas(t, x, w1_t, b1_row, w2_t, b2_row, gate)

    return forward, params


# ---------------------------------------------------------------------------
# Pure-JAX reference (same fixed-step RK4) for a correctness check
# ---------------------------------------------------------------------------
def _reference_forward(t, x0, w1_t, b1_row, w2_t, b2_row, gate, substeps=SUBSTEPS):
    fx = (x0 @ w1_t + b1_row) @ w2_t + b2_row
    g = gate[0]

    def deriv(x):
        return g * (x * (fx - jnp.sum(x * fx, axis=-1, keepdims=True)))

    def interval(x, tp):
        h = (tp[1] - tp[0]) / substeps

        def rk4(_, xc):
            k1 = deriv(xc)
            k2 = deriv(xc + 0.5 * h * k1)
            k3 = deriv(xc + 0.5 * h * k2)
            k4 = deriv(xc + h * k3)
            return xc + (h / 6.0) * (k1 + 2.0 * k2 + 2.0 * k3 + k4)

        xn = lax.fori_loop(0, substeps, rk4, x)
        return xn, xn

    _, ys = lax.scan(interval, x0, jnp.stack([t[:-1], t[1:]], axis=1))
    return jnp.concatenate([x0[None], ys], axis=0)


if __name__ == "__main__":
    # Small but lane/sublane-dense shapes: 8 rows fill the sublanes, 128 species
    # fill the lanes (unmasked vector stores).
    B, N, T = 8, 128, 8
    key = jax.random.PRNGKey(0)
    x0 = jax.nn.softmax(jax.random.normal(key, (B, N), jnp.float32), axis=-1)
    t = jnp.linspace(0.0, 1.0, T, dtype=jnp.float32)

    forward, params = make_cnode2_external_fitness(N, bias=True,
                                                   identity_gate=False, seed=0)
    y = forward(t, x0)                      # [T, B, N], one pallas_call total
    jax.block_until_ready(y)
    assert y.shape == (T, B, N)

    y_ref = _reference_forward(t, x0, *params)
    assert jnp.allclose(y[0], x0)
    assert jnp.allclose(y, y_ref, atol=2e-3, rtol=2e-3), float(
        jnp.max(jnp.abs(y - y_ref)))
    print("KERNEL_OK")
</pallas_src>

<mosaic_0001>
module attributes {stable_mosaic.version = 11 : i64} {
  func.func @_cnode2_extfit_kernel(%arg0: i32, %arg1: memref<8xf32, #tpu.memory_space<smem>>, %arg2: memref<1xf32, #tpu.memory_space<smem>>, %arg3: memref<8x128xf32, #tpu.memory_space<vmem>>, %arg4: memref<128x128xf32, #tpu.memory_space<vmem>>, %arg5: memref<1x128xf32, #tpu.memory_space<vmem>>, %arg6: memref<128x128xf32, #tpu.memory_space<vmem>>, %arg7: memref<1x128xf32, #tpu.memory_space<vmem>>, %arg8: memref<1x8x128xf32, #tpu.memory_space<vmem>>, %arg9: memref<8x128xf32, #tpu.memory_space<vmem>>, %arg10: memref<8x128xf32, #tpu.memory_space<vmem>>) attributes {dimension_semantics = [#tpu.dimension_semantics<arbitrary>], iteration_bounds = array<i64: 8>, scalar_prefetch = 0 : i64, scratch_operands = 2 : i64, tpu.core_type = #tpu.core_type<tc>, window_params = [{transform_indices = @transform_0, window_bounds = array<i64: 8>}, {transform_indices = @transform_1, window_bounds = array<i64: 1>}, {pipeline_mode = #tpu.pipeline_mode<synchronous>, transform_indices = @transform_2, window_bounds = array<i64: 8, 128>}, {pipeline_mode = #tpu.pipeline_mode<synchronous>, transform_indices = @transform_3, window_bounds = array<i64: 128, 128>}, {pipeline_mode = #tpu.pipeline_mode<synchronous>, transform_indices = @transform_4, window_bounds = array<i64: 1, 128>}, {pipeline_mode = #tpu.pipeline_mode<synchronous>, transform_indices = @transform_5, window_bounds = array<i64: 128, 128>}, {pipeline_mode = #tpu.pipeline_mode<synchronous>, transform_indices = @transform_6, window_bounds = array<i64: 1, 128>}, {transform_indices = @transform_7, window_bounds = array<i64: 1, 8, 128>}]} {
    %c0 = arith.constant 0 : index
    %0 = memref.load %arg2[%c0] : memref<1xf32, #tpu.memory_space<smem>>
    %c0_i32 = arith.constant 0 : i32
    %1 = arith.cmpi eq, %arg0, %c0_i32 : i32
    %2 = arith.extui %1 : i1 to i32
    %c0_i32_0 = arith.constant 0 : i32
    %3 = arith.cmpi ne, %2, %c0_i32_0 : i32
    scf.if %3 {
      %c0_3 = arith.constant 0 : index
      %c0_4 = arith.constant 0 : index
      %7 = vector.load %arg3[%c0_3, %c0_4] : memref<8x128xf32, #tpu.memory_space<vmem>>, vector<8x128xf32>
      %c0_5 = arith.constant 0 : index
      %c0_6 = arith.constant 0 : index
      %8 = vector.load %arg4[%c0_5, %c0_6] : memref<128x128xf32, #tpu.memory_space<vmem>>, vector<128x128xf32>
      %cst = arith.constant dense<0.000000e+00> : vector<8x128xf32>
      %9 = tpu.matmul %7, %8, %cst {dimension_numbers = #tpu.dot_dimension_numbers<[1], [0], [0], [1], [0, 0, 1, 1], [], []>} : vector<8x128xf32>, vector<128x128xf32>, vector<8x128xf32> -> vector<8x128xf32>
      %c0_7 = arith.constant 0 : index
      %c0_8 = arith.constant 0 : index
      %10 = vector.load %arg5[%c0_7, %c0_8] : memref<1x128xf32, #tpu.memory_space<vmem>>, vector<1x128xf32>
      %11 = vector.broadcast %10 : vector<1x128xf32> to vector<8x128xf32>
      %12 = arith.addf %9, %11 : vector<8x128xf32>
      %c0_9 = arith.constant 0 : index
      %c0_10 = arith.constant 0 : index
      %13 = vector.load %arg6[%c0_9, %c0_10] : memref<128x128xf32, #tpu.memory_space<vmem>>, vector<128x128xf32>
      %cst_11 = arith.constant dense<0.000000e+00> : vector<8x128xf32>
      %14 = tpu.matmul %12, %13, %cst_11 {dimension_numbers = #tpu.dot_dimension_numbers<[1], [0], [0], [1], [0, 0, 1, 1], [], []>} : vector<8x128xf32>, vector<128x128xf32>, vector<8x128xf32> -> vector<8x128xf32>
      %c0_12 = arith.constant 0 : index
      %c0_13 = arith.constant 0 : index
      %15 = vector.load %arg7[%c0_12, %c0_13] : memref<1x128xf32, #tpu.memory_space<vmem>>, vector<1x128xf32>
      %16 = vector.broadcast %15 : vector<1x128xf32> to vector<8x128xf32>
      %17 = arith.addf %14, %16 : vector<8x128xf32>
      %c0_14 = arith.constant 0 : index
      %c0_15 = arith.constant 0 : index
      %18 = vector.load %arg10[%c0_14, %c0_15] : memref<8x128xf32, #tpu.memory_space<vmem>>, vector<8x128xf32>
      tpu.vector_store %arg10[%c0_14, %c0_15], %17 {strides = array<i32>} : memref<8x128xf32, #tpu.memory_space<vmem>>, vector<8x128xf32>,
      %c0_16 = arith.constant 0 : index
      %c0_17 = arith.constant 0 : index
      %19 = vector.load %arg9[%c0_16, %c0_17] : memref<8x128xf32, #tpu.memory_space<vmem>>, vector<8x128xf32>
      tpu.vector_store %arg9[%c0_16, %c0_17], %7 {strides = array<i32>} : memref<8x128xf32, #tpu.memory_space<vmem>>, vector<8x128xf32>,
      %c0_18 = arith.constant 0 : index
      %c0_19 = arith.constant 0 : index
      %c0_20 = arith.constant 0 : index
      %20 = vector.load %arg8[%c0_18, %c0_19, %c0_20] : memref<1x8x128xf32, #tpu.memory_space<vmem>>, vector<1x8x128xf32>
      %21 = vector.shape_cast %20 : vector<1x8x128xf32> to vector<8x128xf32>
      %22 = vector.shape_cast %7 : vector<8x128xf32> to vector<1x8x128xf32>
      tpu.vector_store %arg8[%c0_18, %c0_19, %c0_20], %22 {strides = array<i32>} : memref<1x8x128xf32, #tpu.memory_space<vmem>>, vector<1x8x128xf32>,
    } else {
    }
    %c0_i32_1 = arith.constant 0 : i32
    %4 = arith.cmpi sgt, %arg0, %c0_i32_1 : i32
    %5 = arith.extui %4 : i1 to i32
    %c0_i32_2 = arith.constant 0 : i32
    %6 = arith.cmpi ne, %5, %c0_i32_2 : i32
    scf.if %6 {
      %c0_3 = arith.constant 0 : index
      %c0_4 = arith.constant 0 : index
      %7 = vector.load %arg10[%c0_3, %c0_4] : memref<8x128xf32, #tpu.memory_space<vmem>>, vector<8x128xf32>
      %c1_i32 = arith.constant 1 : i32
      %8 = arith.subi %arg0, %c1_i32 : i32
      %9 = arith.index_cast %8 : i32 to index
      %10 = memref.load %arg1[%9] : memref<8xf32, #tpu.memory_space<smem>>
      %11 = arith.index_cast %arg0 : i32 to index
      %12 = memref.load %arg1[%11] : memref<8xf32, #tpu.memory_space<smem>>
      %13 = arith.subf %12, %10 : f32
      %cst = arith.constant 4.000000e+00 : f32
      %14 = arith.divf %13, %cst : f32
      %c0_5 = arith.constant 0 : index
      %c0_6 = arith.constant 0 : index
      %15 = vector.load %arg9[%c0_5, %c0_6] : memref<8x128xf32, #tpu.memory_space<vmem>>, vector<8x128xf32>
      %c0_i32_7 = arith.constant 0 : i32
      %16 = arith.mulf %15, %7 : vector<8x128xf32>
      %cst_8 = arith.constant dense<0.000000e+00> : vector<8xf32>
      %17 = vector.multi_reduction <add>, %16, %cst_8 [1] : vector<8x128xf32> to vector<8xf32>
      %18 = vector.shape_cast %17 : vector<8xf32> to vector<8x1xf32>
      %19 = vector.broadcast %18 : vector<8x1xf32> to vector<8x128xf32>
      %20 = arith.subf %7, %19 : vector<8x128xf32>
      %21 = arith.mulf %15, %20 : vector<8x128xf32>
      %22 = vector.broadcast %0 : f32 to vector<8x128xf32>
      %23 = arith.mulf %22, %21 : vector<8x128xf32>
      %cst_9 = arith.constant 5.000000e-01 : f32
      %24 = arith.mulf %cst_9, %14 : f32
      %25 = vector.broadcast %24 : f32 to vector<8x128xf32>
      %26 = arith.mulf %25, %23 : vector<8x128xf32>
      %27 = arith.addf %15, %26 : vector<8x128xf32>
      %28 = arith.mulf %27, %7 : vector<8x128xf32>
      %cst_10 = arith.constant dense<0.000000e+00> : vector<8xf32>
      %29 = vector.multi_reduction <add>, %28, %cst_10 [1] : vector<8x128xf32> to vector<8xf32>
      %30 = vector.shape_cast %29 : vector<8xf32> to vector<8x1xf32>
      %31 = vector.broadcast %30 : vector<8x1xf32> to vector<8x128xf32>
      %32 = arith.subf %7, %31 : vector<8x128xf32>
      %33 = arith.mulf %27, %32 : vector<8x128xf32>
      %34 = vector.broadcast %0 : f32 to vector<8x128xf32>
      %35 = arith.mulf %34, %33 : vector<8x128xf32>
      %cst_11 = arith.constant 5.000000e-01 : f32
      %36 = arith.mulf %cst_11, %14 : f32
      %37 = vector.broadcast %36 : f32 to vector<8x128xf32>
      %38 = arith.mulf %37, %35 : vector<8x128xf32>
      %39 = arith.addf %15, %38 : vector<8x128xf32>
      %40 = arith.mulf %39, %7 : vector<8x128xf32>
      %cst_12 = arith.constant dense<0.000000e+00> : vector<8xf32>
      %41 = vector.multi_reduction <add>, %40, %cst_12 [1] : vector<8x128xf32> to vector<8xf32>
      %42 = vector.shape_cast %41 : vector<8xf32> to vector<8x1xf32>
      %43 = vector.broadcast %42 : vector<8x1xf32> to vector<8x128xf32>
      %44 = arith.subf %7, %43 : vector<8x128xf32>
      %45 = arith.mulf %39, %44 : vector<8x128xf32>
      %46 = vector.broadcast %0 : f32 to vector<8x128xf32>
      %47 = arith.mulf %46, %45 : vector<8x128xf32>
      %48 = vector.broadcast %14 : f32 to vector<8x128xf32>
      %49 = arith.mulf %48, %47 : vector<8x128xf32>
      %50 = arith.addf %15, %49 : vector<8x128xf32>
      %51 = arith.mulf %50, %7 : vector<8x128xf32>
      %cst_13 = arith.constant dense<0.000000e+00> : vector<8xf32>
      %52 = vector.multi_reduction <add>, %51, %cst_13 [1] : vector<8x128xf32> to vector<8xf32>
      %53 = vector.shape_cast %52 : vector<8xf32> to vector<8x1xf32>
      %54 = vector.broadcast %53 : vector<8x1xf32> to vector<8x128xf32>
      %55 = arith.subf %7, %54 : vector<8x128xf32>
      %56 = arith.mulf %50, %55 : vector<8x128xf32>
      %57 = vector.broadcast %0 : f32 to vector<8x128xf32>
      %58 = arith.mulf %57, %56 : vector<8x128xf32>
      %cst_14 = arith.constant 6.000000e+00 : f32
      %59 = arith.divf %14, %cst_14 : f32
      %cst_15 = arith.constant 2.000000e+00 : f32
      %60 = vector.broadcast %cst_15 : f32 to vector<8x128xf32>
      %61 = arith.mulf %60, %35 : vector<8x128xf32>
      %62 = arith.addf %23, %61 : vector<8x128xf32>
      %cst_16 = arith.constant 2.000000e+00 : f32
      %63 = vector.broadcast %cst_16 : f32 to vector<8x128xf32>
      %64 = arith.mulf %63, %47 : vector<8x128xf32>
      %65 = arith.addf %62, %64 : vector<8x128xf32>
      %66 = arith.addf %65, %58 : vector<8x128xf32>
      %67 = vector.broadcast %59 : f32 to vector<8x128xf32>
      %68 = arith.mulf %67, %66 : vector<8x128xf32>
      %69 = arith.addf %15, %68 : vector<8x128xf32>
      %c1_i32_17 = arith.constant 1 : i32
      %70 = arith.mulf %69, %7 : vector<8x128xf32>
      %cst_18 = arith.constant dense<0.000000e+00> : vector<8xf32>
      %71 = vector.multi_reduction <add>, %70, %cst_18 [1] : vector<8x128xf32> to vector<8xf32>
      %72 = vector.shape_cast %71 : vector<8xf32> to vector<8x1xf32>
      %73 = vector.broadcast %72 : vector<8x1xf32> to vector<8x128xf32>
      %74 = arith.subf %7, %73 : vector<8x128xf32>
      %75 = arith.mulf %69, %74 : vector<8x128xf32>
      %76 = vector.broadcast %0 : f32 to vector<8x128xf32>
      %77 = arith.mulf %76, %75 : vector<8x128xf32>
      %cst_19 = arith.constant 5.000000e-01 : f32
      %78 = arith.mulf %cst_19, %14 : f32
      %79 = vector.broadcast %78 : f32 to vector<8x128xf32>
      %80 = arith.mulf %79, %77 : vector<8x128xf32>
      %81 = arith.addf %69, %80 : vector<8x128xf32>
      %82 = arith.mulf %81, %7 : vector<8x128xf32>
      %cst_20 = arith.constant dense<0.000000e+00> : vector<8xf32>
      %83 = vector.multi_reduction <add>, %82, %cst_20 [1] : vector<8x128xf32> to vector<8xf32>
      %84 = vector.shape_cast %83 : vector<8xf32> to vector<8x1xf32>
      %85 = vector.broadcast %84 : vector<8x1xf32> to vector<8x128xf32>
      %86 = arith.subf %7, %85 : vector<8x128xf32>
      %87 = arith.mulf %81, %86 : vector<8x128xf32>
      %88 = vector.broadcast %0 : f32 to vector<8x128xf32>
      %89 = arith.mulf %88, %87 : vector<8x128xf32>
      %cst_21 = arith.constant 5.000000e-01 : f32
      %90 = arith.mulf %cst_21, %14 : f32
      %91 = vector.broadcast %90 : f32 to vector<8x128xf32>
      %92 = arith.mulf %91, %89 : vector<8x128xf32>
      %93 = arith.addf %69, %92 : vector<8x128xf32>
      %94 = arith.mulf %93, %7 : vector<8x128xf32>
      %cst_22 = arith.constant dense<0.000000e+00> : vector<8xf32>
      %95 = vector.multi_reduction <add>, %94, %cst_22 [1] : vector<8x128xf32> to vector<8xf32>
      %96 = vector.shape_cast %95 : vector<8xf32> to vector<8x1xf32>
      %97 = vector.broadcast %96 : vector<8x1xf32> to vector<8x128xf32>
      %98 = arith.subf %7, %97 : vector<8x128xf32>
      %99 = arith.mulf %93, %98 : vector<8x128xf32>
      %100 = vector.broadcast %0 : f32 to vector<8x128xf32>
      %101 = arith.mulf %100, %99 : vector<8x128xf32>
      %102 = vector.broadcast %14 : f32 to vector<8x128xf32>
      %103 = arith.mulf %102, %101 : vector<8x128xf32>
      %104 = arith.addf %69, %103 : vector<8x128xf32>
      %105 = arith.mulf %104, %7 : vector<8x128xf32>
      %cst_23 = arith.constant dense<0.000000e+00> : vector<8xf32>
      %106 = vector.multi_reduction <add>, %105, %cst_23 [1] : vector<8x128xf32> to vector<8xf32>
      %107 = vector.shape_cast %106 : vector<8xf32> to vector<8x1xf32>
      %108 = vector.broadcast %107 : vector<8x1xf32> to vector<8x128xf32>
      %109 = arith.subf %7, %108 : vector<8x128xf32>
      %110 = arith.mulf %104, %109 : vector<8x128xf32>
      %111 = vector.broadcast %0 : f32 to vector<8x128xf32>
      %112 = arith.mulf %111, %110 : vector<8x128xf32>
      %cst_24 = arith.constant 6.000000e+00 : f32
      %113 = arith.divf %14, %cst_24 : f32
      %cst_25 = arith.constant 2.000000e+00 : f32
      %114 = vector.broadcast %cst_25 : f32 to vector<8x128xf32>
      %115 = arith.mulf %114, %89 : vector<8x128xf32>
      %116 = arith.addf %77, %115 : vector<8x128xf32>
      %cst_26 = arith.constant 2.000000e+00 : f32
      %117 = vector.broadcast %cst_26 : f32 to vector<8x128xf32>
      %118 = arith.mulf %117, %101 : vector<8x128xf32>
      %119 = arith.addf %116, %118 : vector<8x128xf32>
      %120 = arith.addf %119, %112 : vector<8x128xf32>
      %121 = vector.broadcast %113 : f32 to vector<8x128xf32>
      %122 = arith.mulf %121, %120 : vector<8x128xf32>
      %123 = arith.addf %69, %122 : vector<8x128xf32>
      %c2_i32 = arith.constant 2 : i32
      %124 = arith.mulf %123, %7 : vector<8x128xf32>
      %cst_27 = arith.constant dense<0.000000e+00> : vector<8xf32>
      %125 = vector.multi_reduction <add>, %124, %cst_27 [1] : vector<8x128xf32> to vector<8xf32>
      %126 = vector.shape_cast %125 : vector<8xf32> to vector<8x1xf32>
      %127 = vector.broadcast %126 : vector<8x1xf32> to vector<8x128xf32>
      %128 = arith.subf %7, %127 : vector<8x128xf32>
      %129 = arith.mulf %123, %128 : vector<8x128xf32>
      %130 = vector.broadcast %0 : f32 to vector<8x128xf32>
      %131 = arith.mulf %130, %129 : vector<8x128xf32>
      %cst_28 = arith.constant 5.000000e-01 : f32
      %132 = arith.mulf %cst_28, %14 : f32
      %133 = vector.broadcast %132 : f32 to vector<8x128xf32>
      %134 = arith.mulf %133, %131 : vector<8x128xf32>
      %135 = arith.addf %123, %134 : vector<8x128xf32>
      %136 = arith.mulf %135, %7 : vector<8x128xf32>
      %cst_29 = arith.constant dense<0.000000e+00> : vector<8xf32>
      %137 = vector.multi_reduction <add>, %136, %cst_29 [1] : vector<8x128xf32> to vector<8xf32>
      %138 = vector.shape_cast %137 : vector<8xf32> to vector<8x1xf32>
      %139 = vector.broadcast %138 : vector<8x1xf32> to vector<8x128xf32>
      %140 = arith.subf %7, %139 : vector<8x128xf32>
      %141 = arith.mulf %135, %140 : vector<8x128xf32>
      %142 = vector.broadcast %0 : f32 to vector<8x128xf32>
      %143 = arith.mulf %142, %141 : vector<8x128xf32>
      %cst_30 = arith.constant 5.000000e-01 : f32
      %144 = arith.mulf %cst_30, %14 : f32
      %145 = vector.broadcast %144 : f32 to vector<8x128xf32>
      %146 = arith.mulf %145, %143 : vector<8x128xf32>
      %147 = arith.addf %123, %146 : vector<8x128xf32>
      %148 = arith.mulf %147, %7 : vector<8x128xf32>
      %cst_31 = arith.constant dense<0.000000e+00> : vector<8xf32>
      %149 = vector.multi_reduction <add>, %148, %cst_31 [1] : vector<8x128xf32> to vector<8xf32>
      %150 = vector.shape_cast %149 : vector<8xf32> to vector<8x1xf32>
      %151 = vector.broadcast %150 : vector<8x1xf32> to vector<8x128xf32>
      %152 = arith.subf %7, %151 : vector<8x128xf32>
      %153 = arith.mulf %147, %152 : vector<8x128xf32>
      %154 = vector.broadcast %0 : f32 to vector<8x128xf32>
      %155 = arith.mulf %154, %153 : vector<8x128xf32>
      %156 = vector.broadcast %14 : f32 to vector<8x128xf32>
      %157 = arith.mulf %156, %155 : vector<8x128xf32>
      %158 = arith.addf %123, %157 : vector<8x128xf32>
      %159 = arith.mulf %158, %7 : vector<8x128xf32>
      %cst_32 = arith.constant dense<0.000000e+00> : vector<8xf32>
      %160 = vector.multi_reduction <add>, %159, %cst_32 [1] : vector<8x128xf32> to vector<8xf32>
      %161 = vector.shape_cast %160 : vector<8xf32> to vector<8x1xf32>
      %162 = vector.broadcast %161 : vector<8x1xf32> to vector<8x128xf32>
      %163 = arith.subf %7, %162 : vector<8x128xf32>
      %164 = arith.mulf %158, %163 : vector<8x128xf32>
      %165 = vector.broadcast %0 : f32 to vector<8x128xf32>
      %166 = arith.mulf %165, %164 : vector<8x128xf32>
      %cst_33 = arith.constant 6.000000e+00 : f32
      %167 = arith.divf %14, %cst_33 : f32
      %cst_34 = arith.constant 2.000000e+00 : f32
      %168 = vector.broadcast %cst_34 : f32 to vector<8x128xf32>
      %169 = arith.mulf %168, %143 : vector<8x128xf32>
      %170 = arith.addf %131, %169 : vector<8x128xf32>
      %cst_35 = arith.constant 2.000000e+00 : f32
      %171 = vector.broadcast %cst_35 : f32 to vector<8x128xf32>
      %172 = arith.mulf %171, %155 : vector<8x128xf32>
      %173 = arith.addf %170, %172 : vector<8x128xf32>
      %174 = arith.addf %173, %166 : vector<8x128xf32>
      %175 = vector.broadcast %167 : f32 to vector<8x128xf32>
      %176 = arith.mulf %175, %174 : vector<8x128xf32>
      %177 = arith.addf %123, %176 : vector<8x128xf32>
      %c3_i32 = arith.constant 3 : i32
      %178 = arith.mulf %177, %7 : vector<8x128xf32>
      %cst_36 = arith.constant dense<0.000000e+00> : vector<8xf32>
      %179 = vector.multi_reduction <add>, %178, %cst_36 [1] : vector<8x128xf32> to vector<8xf32>
      %180 = vector.shape_cast %179 : vector<8xf32> to vector<8x1xf32>
      %181 = vector.broadcast %180 : vector<8x1xf32> to vector<8x128xf32>
      %182 = arith.subf %7, %181 : vector<8x128xf32>
      %183 = arith.mulf %177, %182 : vector<8x128xf32>
      %184 = vector.broadcast %0 : f32 to vector<8x128xf32>
      %185 = arith.mulf %184, %183 : vector<8x128xf32>
      %cst_37 = arith.constant 5.000000e-01 : f32
      %186 = arith.mulf %cst_37, %14 : f32
      %187 = vector.broadcast %186 : f32 to vector<8x128xf32>
      %188 = arith.mulf %187, %185 : vector<8x128xf32>
      %189 = arith.addf %177, %188 : vector<8x128xf32>
      %190 = arith.mulf %189, %7 : vector<8x128xf32>
      %cst_38 = arith.constant dense<0.000000e+00> : vector<8xf32>
      %191 = vector.multi_reduction <add>, %190, %cst_38 [1] : vector<8x128xf32> to vector<8xf32>
      %192 = vector.shape_cast %191 : vector<8xf32> to vector<8x1xf32>
      %193 = vector.broadcast %192 : vector<8x1xf32> to vector<8x128xf32>
      %194 = arith.subf %7, %193 : vector<8x128xf32>
      %195 = arith.mulf %189, %194 : vector<8x128xf32>
      %196 = vector.broadcast %0 : f32 to vector<8x128xf32>
      %197 = arith.mulf %196, %195 : vector<8x128xf32>
      %cst_39 = arith.constant 5.000000e-01 : f32
      %198 = arith.mulf %cst_39, %14 : f32
      %199 = vector.broadcast %198 : f32 to vector<8x128xf32>
      %200 = arith.mulf %199, %197 : vector<8x128xf32>
      %201 = arith.addf %177, %200 : vector<8x128xf32>
      %202 = arith.mulf %201, %7 : vector<8x128xf32>
      %cst_40 = arith.constant dense<0.000000e+00> : vector<8xf32>
      %203 = vector.multi_reduction <add>, %202, %cst_40 [1] : vector<8x128xf32> to vector<8xf32>
      %204 = vector.shape_cast %203 : vector<8xf32> to vector<8x1xf32>
      %205 = vector.broadcast %204 : vector<8x1xf32> to vector<8x128xf32>
      %206 = arith.subf %7, %205 : vector<8x128xf32>
      %207 = arith.mulf %201, %206 : vector<8x128xf32>
      %208 = vector.broadcast %0 : f32 to vector<8x128xf32>
      %209 = arith.mulf %208, %207 : vector<8x128xf32>
      %210 = vector.broadcast %14 : f32 to vector<8x128xf32>
      %211 = arith.mulf %210, %209 : vector<8x128xf32>
      %212 = arith.addf %177, %211 : vector<8x128xf32>
      %213 = arith.mulf %212, %7 : vector<8x128xf32>
      %cst_41 = arith.constant dense<0.000000e+00> : vector<8xf32>
      %214 = vector.multi_reduction <add>, %213, %cst_41 [1] : vector<8x128xf32> to vector<8xf32>
      %215 = vector.shape_cast %214 : vector<8xf32> to vector<8x1xf32>
      %216 = vector.broadcast %215 : vector<8x1xf32> to vector<8x128xf32>
      %217 = arith.subf %7, %216 : vector<8x128xf32>
      %218 = arith.mulf %212, %217 : vector<8x128xf32>
      %219 = vector.broadcast %0 : f32 to vector<8x128xf32>
      %220 = arith.mulf %219, %218 : vector<8x128xf32>
      %cst_42 = arith.constant 6.000000e+00 : f32
      %221 = arith.divf %14, %cst_42 : f32
      %cst_43 = arith.constant 2.000000e+00 : f32
      %222 = vector.broadcast %cst_43 : f32 to vector<8x128xf32>
      %223 = arith.mulf %222, %197 : vector<8x128xf32>
      %224 = arith.addf %185, %223 : vector<8x128xf32>
      %cst_44 = arith.constant 2.000000e+00 : f32
      %225 = vector.broadcast %cst_44 : f32 to vector<8x128xf32>
      %226 = arith.mulf %225, %209 : vector<8x128xf32>
      %227 = arith.addf %224, %226 : vector<8x128xf32>
      %228 = arith.addf %227, %220 : vector<8x128xf32>
      %229 = vector.broadcast %221 : f32 to vector<8x128xf32>
      %230 = arith.mulf %229, %228 : vector<8x128xf32>
      %231 = arith.addf %177, %230 : vector<8x128xf32>
      %c0_45 = arith.constant 0 : index
      %c0_46 = arith.constant 0 : index
      %232 = vector.load %arg9[%c0_45, %c0_46] : memref<8x128xf32, #tpu.memory_space<vmem>>, vector<8x128xf32>
      tpu.vector_store %arg9[%c0_45, %c0_46], %231 {strides = array<i32>} : memref<8x128xf32, #tpu.memory_space<vmem>>, vector<8x128xf32>,
      %c0_47 = arith.constant 0 : index
      %c0_48 = arith.constant 0 : index
      %c0_49 = arith.constant 0 : index
      %233 = vector.load %arg8[%c0_47, %c0_48, %c0_49] : memref<1x8x128xf32, #tpu.memory_space<vmem>>, vector<1x8x128xf32>
      %234 = vector.shape_cast %233 : vector<1x8x128xf32> to vector<8x128xf32>
      %235 = vector.shape_cast %231 : vector<8x128xf32> to vector<1x8x128xf32>
      tpu.vector_store %arg8[%c0_47, %c0_48, %c0_49], %235 {strides = array<i32>} : memref<1x8x128xf32, #tpu.memory_space<vmem>>, vector<1x8x128xf32>,
    } else {
    }
    return
  }
  func.func @transform_0(%arg0: i32) -> i32 {
    %c0_i32 = arith.constant 0 : i32
    %c0_i32_0 = arith.constant 0 : i32
    return %c0_i32 : i32
  }
  func.func @transform_1(%arg0: i32) -> i32 {
    %c0_i32 = arith.constant 0 : i32
    %c0_i32_0 = arith.constant 0 : i32
    return %c0_i32 : i32
  }
  func.func @transform_2(%arg0: i32) -> (i32, i32) {
    %c0_i32 = arith.constant 0 : i32
    %c0_i32_0 = arith.constant 0 : i32
    %c0_i32_1 = arith.constant 0 : i32
    return %c0_i32, %c0_i32_0 : i32, i32
  }
  func.func @transform_3(%arg0: i32) -> (i32, i32) {
    %c0_i32 = arith.constant 0 : i32
    %c0_i32_0 = arith.constant 0 : i32
    %c0_i32_1 = arith.constant 0 : i32
    return %c0_i32, %c0_i32_0 : i32, i32
  }
  func.func @transform_4(%arg0: i32) -> (i32, i32) {
    %c0_i32 = arith.constant 0 : i32
    %c0_i32_0 = arith.constant 0 : i32
    %c0_i32_1 = arith.constant 0 : i32
    return %c0_i32, %c0_i32_0 : i32, i32
  }
  func.func @transform_5(%arg0: i32) -> (i32, i32) {
    %c0_i32 = arith.constant 0 : i32
    %c0_i32_0 = arith.constant 0 : i32
    %c0_i32_1 = arith.constant 0 : i32
    return %c0_i32, %c0_i32_0 : i32, i32
  }
  func.func @transform_6(%arg0: i32) -> (i32, i32) {
    %c0_i32 = arith.constant 0 : i32
    %c0_i32_0 = arith.constant 0 : i32
    %c0_i32_1 = arith.constant 0 : i32
    return %c0_i32, %c0_i32_0 : i32, i32
  }
  func.func @transform_7(%arg0: i32) -> (i32, i32, i32) {
    %c0_i32 = arith.constant 0 : i32
    %c0_i32_0 = arith.constant 0 : i32
    %c0_i32_1 = arith.constant 0 : i32
    return %arg0, %c0_i32, %c0_i32_0 : i32, i32, i32
  }
}

</mosaic_0001>

<llo_original>
// kernel: forward.1
$region0: #{forward.1}
  #allocation0 [shape = 'u32[]', space=smem, size = 0x4, offset = 0x4, fixed_abs, tag = 'smem constant byte address 0x4 - core index']
  #allocation1 [shape = 'u32[144,128]{1,0:T(1,128)}', space=vmem, size = 0x12000, scoped, tag = 'internal scratch']
  #allocation2 [shape = 'f32[8,128]{1,0:T(8,128)}', space=vmem, size = 0x1000, scoped, tag = 'scratch operand']
  #allocation3 [shape = 'f32[8,128]{1,0:T(8,128)}', space=vmem, size = 0x1000, scoped, tag = 'scratch operand']
  #allocation4 [shape = 'f32[1]{0:T(128)S(6)}', space=smem, size = 0x200, scoped, tag = 'scoped memory for forward.1']
  %s0 = inlined_call_operand.hbm [shape: f32[8], index: 0, kind: input, shape index: {}]
  %s1 = inlined_call_operand.<no memory space> [shape: f32[1], index: 1, kind: input, shape index: {}]
  %s2 = inlined_call_operand.hbm [shape: f32[8,128], index: 2, kind: input, shape index: {}]
  %s3 = inlined_call_operand.hbm [shape: f32[128,128], index: 3, kind: input, shape index: {}]
  %s4 = inlined_call_operand.vmem [shape: f32[1,128], index: 4, kind: input, shape index: {}]
  %s5 = inlined_call_operand.hbm [shape: f32[128,128], index: 5, kind: input, shape index: {}]
  %s6 = inlined_call_operand.vmem [shape: f32[1,128], index: 6, kind: input, shape index: {}]
  %s7 = inlined_call_operand.hbm [shape: f32[8,8,128], index: 7, kind: output, shape index: {}]
  %s8 = sld [smem:[#allocation0]]
  $region85: #{forward.1} parent=0
    _
  %s10 = ssub.s32 1, %s8
  %s11 = scalar_select 0, %s10, %s8
  %12 = sst [smem:[#allocation4]] %s1
  $region1: #{forward.1} parent=0
    #allocation5 [shape = 'u8[512]{0}', space=smem, size = 0x200, scoped, tag = 'input window, operand 0, single buffered']
    #allocation6 [shape = 's32[2]{0}', space=sflag, size = 0x8, scoped, tag = 'scoped memory for forward.1']
    #allocation7 [shape = 's32[2]{0}', space=sflag, size = 0x8, scoped, tag = 'scoped memory for forward.1']
    #allocation8 [shape = 's32[2]{0}', space=sflag, size = 0x8, scoped, tag = 'scoped memory for forward.1']
    #allocation9 [shape = 'u8[4096]{0}', space=vmem, size = 0x1000, scoped, tag = 'input window, operand 2, single buffered']
    #allocation10 [shape = 'u8[65536]{0}', space=vmem, size = 0x10000, scoped, tag = 'input window, operand 3, single buffered']
    #allocation11 [shape = 's32[1]{0}', space=sflag, size = 0x4, scoped, tag = 'scoped memory for forward.1']
    #allocation12 [shape = 'u8[65536]{0}', space=vmem, size = 0x10000, scoped, tag = 'input window, operand 5, single buffered']
    #allocation13 [shape = 'u8[8192]{0}', space=vmem, size = 0x2000, scoped, tag = 'output window, operand 0']
    %13 = vsyncpa [#allocation8], 0
    %14 = vsyncpa [#allocation6], 0
    %15 = vsyncpa [#allocation11], 0
    %16 = vsyncpa [#allocation7], 0
    %s17 = scalar_lea.sflag [#allocation7], 1
    %18 = vsyncpa %s17, 0
    loop: start=0, step=1, limit=10
    $region2: #{forward.1} parent=1 // loop_pre_header
      _
    $region3: #{forward.1} parent=1 // loop_header
      %s20 = sphi 0, %s24
      %p21 = scmp.ge.s32.totalorder %s20, 10
      %s28 = sphi 0, %s28
      %s30 = sphi 0, %s28
      %s31 = sphi 0, %s30
      %s45 = sphi 0, %s31
      %s49 = sphi 0, %s49
      %s51 = sphi 0, %s49
      %s52 = sphi 0, %s51
      %s66 = sphi 0, %s52
      %s70 = sphi 0, %s70
      %s72 = sphi 0, %s70
      %s73 = sphi 0, %s72
      %s87 = sphi 0, %s73
      %s91 = sphi 0, %s91
      %s93 = sphi 0, %s91
      %s94 = sphi 0, %s93
      %s108 = sphi 0, %s94
      %s112 = sphi 0, %s112
      %s114 = sphi 0, %s112
      %s115 = sphi 0, %s114
      %s129 = sphi 0, %s115
      %s133 = sphi 0, %s133
      %s135 = sphi 0, %s133
      %s136 = sphi 0, %s135
      %s150 = sphi 0, %s136
      %s154 = sphi 0, %s154
      %s156 = sphi 0, %s154
      %s157 = sphi 0, %s156
      %s171 = sphi 0, %s157
      %s177 = sphi 0, %s179
      %s180 = sphi 0, %s177
      %s181 = sphi 0, %s180
      %s197 = sphi 0, %s181
    $region4: #{forward.1} parent=1 // loop_header_branch
      %23 = sbr.rel (%p21) target = $region8
    $region5: #{forward.1} parent=1 // loop_body
      %s25 = ssub.s32 %s20, 1
      %s26 = ssub.s32 %s20, 2
      %s27 = sadd.s32 %s20, 1
      %s29 = sadd.s32 %s28, 1
      %p32 = scmp.eq.s32.totalorder %s20, 7
      %p33 = scmp.ne.s32.totalorder %s28, %s30
      %p34 = scmp.eq.s32.totalorder %s20, 0
      %p35 = por %p33, %p34
      %p36 = scmp.ne.s32.totalorder %s28, %s30
      %p37 = scmp.eq.s32.totalorder %s25, 7
      %p38 = por %p36, %p37
      %p39 = scmp.ne.s32.totalorder %s30, %s31
      %p40 = scmp.eq.s32.totalorder %s25, 0
      %p41 = por %p39, %p40
      %p42 = scmp.ne.s32.totalorder %s30, %s31
      %p43 = scmp.eq.s32.totalorder %s26, 7
      %p44 = por %p42, %p43
      %p46 = scmp.ne.s32.totalorder %s31, %s45
      %p47 = scmp.eq.s32.totalorder %s26, 0
      %p48 = por %p46, %p47
      %s50 = sadd.s32 %s49, 1
      %p53 = scmp.eq.s32.totalorder %s20, 7
      %p54 = scmp.ne.s32.totalorder %s49, %s51
      %p55 = scmp.eq.s32.totalorder %s20, 0
      %p56 = por %p54, %p55
      %p57 = scmp.ne.s32.totalorder %s49, %s51
      %p58 = scmp.eq.s32.totalorder %s25, 7
      %p59 = por %p57, %p58
      %p60 = scmp.ne.s32.totalorder %s51, %s52
      %p61 = scmp.eq.s32.totalorder %s25, 0
      %p62 = por %p60, %p61
      %p63 = scmp.ne.s32.totalorder %s51, %s52
      %p64 = scmp.eq.s32.totalorder %s26, 7
      %p65 = por %p63, %p64
      %p67 = scmp.ne.s32.totalorder %s52, %s66
      %p68 = scmp.eq.s32.totalorder %s26, 0
      %p69 = por %p67, %p68
      %s71 = sadd.s32 %s70, 1
      %p74 = scmp.eq.s32.totalorder %s20, 7
      %p75 = scmp.ne.s32.totalorder %s70, %s72
      %p76 = scmp.eq.s32.totalorder %s20, 0
      %p77 = por %p75, %p76
      %p78 = scmp.ne.s32.totalorder %s70, %s72
      %p79 = scmp.eq.s32.totalorder %s25, 7
      %p80 = por %p78, %p79
      %p81 = scmp.ne.s32.totalorder %s72, %s73
      %p82 = scmp.eq.s32.totalorder %s25, 0
      %p83 = por %p81, %p82
      %p84 = scmp.ne.s32.totalorder %s72, %s73
      %p85 = scmp.eq.s32.totalorder %s26, 7
      %p86 = por %p84, %p85
      %p88 = scmp.ne.s32.totalorder %s73, %s87
      %p89 = scmp.eq.s32.totalorder %s26, 0
      %p90 = por %p88, %p89
      %s92 = sadd.s32 %s91, 1
      %p95 = scmp.eq.s32.totalorder %s20, 7
      %p96 = scmp.ne.s32.totalorder %s91, %s93
      %p97 = scmp.eq.s32.totalorder %s20, 0
      %p98 = por %p96, %p97
      %p99 = scmp.ne.s32.totalorder %s91, %s93
      %p100 = scmp.eq.s32.totalorder %s25, 7
      %p101 = por %p99, %p100
      %p102 = scmp.ne.s32.totalorder %s93, %s94
      %p103 = scmp.eq.s32.totalorder %s25, 0
      %p104 = por %p102, %p103
      %p105 = scmp.ne.s32.totalorder %s93, %s94
      %p106 = scmp.eq.s32.totalorder %s26, 7
      %p107 = por %p105, %p106
      %p109 = scmp.ne.s32.totalorder %s94, %s108
      %p110 = scmp.eq.s32.totalorder %s26, 0
      %p111 = por %p109, %p110
      %s113 = sadd.s32 %s112, 1
      %p116 = scmp.eq.s32.totalorder %s20, 7
      %p117 = scmp.ne.s32.totalorder %s112, %s114
      %p118 = scmp.eq.s32.totalorder %s20, 0
      %p119 = por %p117, %p118
      %p120 = scmp.ne.s32.totalorder %s112, %s114
      %p121 = scmp.eq.s32.totalorder %s25, 7
      %p122 = por %p120, %p121
      %p123 = scmp.ne.s32.totalorder %s114, %s115
      %p124 = scmp.eq.s32.totalorder %s25, 0
      %p125 = por %p123, %p124
      %p126 = scmp.ne.s32.totalorder %s114, %s115
      %p127 = scmp.eq.s32.totalorder %s26, 7
      %p128 = por %p126, %p127
      %p130 = scmp.ne.s32.totalorder %s115, %s129
      %p131 = scmp.eq.s32.totalorder %s26, 0
      %p132 = por %p130, %p131
      %s134 = sadd.s32 %s133, 1
      %p137 = scmp.eq.s32.totalorder %s20, 7
      %p138 = scmp.ne.s32.totalorder %s133, %s135
      %p139 = scmp.eq.s32.totalorder %s20, 0
      %p140 = por %p138, %p139
      %p141 = scmp.ne.s32.totalorder %s133, %s135
      %p142 = scmp.eq.s32.totalorder %s25, 7
      %p143 = por %p141, %p142
      %p144 = scmp.ne.s32.totalorder %s135, %s136
      %p145 = scmp.eq.s32.totalorder %s25, 0
      %p146 = por %p144, %p145
      %p147 = scmp.ne.s32.totalorder %s135, %s136
      %p148 = scmp.eq.s32.totalorder %s26, 7
      %p149 = por %p147, %p148
      %p151 = scmp.ne.s32.totalorder %s136, %s150
      %p152 = scmp.eq.s32.totalorder %s26, 0
      %p153 = por %p151, %p152
      %s155 = sadd.s32 %s154, 1
      %p158 = scmp.eq.s32.totalorder %s20, 7
      %p159 = scmp.ne.s32.totalorder %s154, %s156
      %p160 = scmp.eq.s32.totalorder %s20, 0
      %p161 = por %p159, %p160
      %p162 = scmp.ne.s32.totalorder %s154, %s156
      %p163 = scmp.eq.s32.totalorder %s25, 7
      %p164 = por %p162, %p163
      %p165 = scmp.ne.s32.totalorder %s156, %s157
      %p166 = scmp.eq.s32.totalorder %s25, 0
      %p167 = por %p165, %p166
      %p168 = scmp.ne.s32.totalorder %s156, %s157
      %p169 = scmp.eq.s32.totalorder %s26, 7
      %p170 = por %p168, %p169
      %p172 = scmp.ne.s32.totalorder %s157, %s171
      %p173 = scmp.eq.s32.totalorder %s26, 0
      %p174 = por %p172, %p173
      %s175 = ssub.s32 %s20, %s27
      %p176 = scmp.eq.s32.totalorder %s175, 0
      %s178 = sadd.s32 %s177, 1
      %s179 = scalar_select %p176, %s177, %s178
      %p182 = pneg %p176
      %p183 = scmp.eq.s32.totalorder %s20, 7
      %p184 = por %p182, %p183
      %p185 = scmp.ne.s32.totalorder %s177, %s180
      %p186 = scmp.eq.s32.totalorder %s20, 0
      %p187 = por %p185, %p186
      %p188 = scmp.ne.s32.totalorder %s177, %s180
      %p189 = scmp.eq.s32.totalorder %s25, 7
      %p190 = por %p188, %p189
      %p191 = scmp.ne.s32.totalorder %s180, %s181
      %p192 = scmp.eq.s32.totalorder %s25, 0
      %p193 = por %p191, %p192
      %p194 = scmp.ne.s32.totalorder %s180, %s181
      %p195 = scmp.eq.s32.totalorder %s26, 7
      %p196 = por %p194, %p195
      %p198 = scmp.ne.s32.totalorder %s181, %s197
      %p199 = scmp.eq.s32.totalorder %s26, 0
      %p200 = por %p198, %p199
      %p201 = scmp.le.s32.totalorder 1, %s20
      %p202 = scmp.lt.s32.totalorder %s20, 9
      %p203 = pnand %p201, %p202
      %p204 = pneg %p203
      // Predicated region
      $region9: #{forward.1} parent=5 // pred_check
        _
      $region10: #{forward.1} parent=5 // pred_check_branch
        %206 = sbr.rel (%p203) target = $region12
      $region11: #{forward.1} parent=5 // pred_region
        %s207 = ssub.s32 %s20, 1
        // Predicated region
        $region13: #{forward.1} parent=11 // pred_check
          %p208 = pneg %p41
        $region14: #{forward.1} parent=11 // pred_check_branch
          %210 = sbr.rel (%p208) target = $region16
        $region15: #{forward.1} parent=11 // pred_region
          %s212 = ssub.s32 16, 16
          %213 = vsyncadd [#allocation8], %s212
          %216 = dma.hbm_to_smem %s0, 16, [#allocation5], [#allocation8]
        $region16: #{forward.1} parent=11 // pred_fallthru
          _
        // Predicated region
        $region17: #{forward.1} parent=11 // pred_check
          %p217 = pneg %p62
        $region18: #{forward.1} parent=11 // pred_check_branch
          %219 = sbr.rel (%p217) target = $region20
        $region19: #{forward.1} parent=11 // pred_region
          _
        $region20: #{forward.1} parent=11 // pred_fallthru
          _
        // Predicated region
        $region21: #{forward.1} parent=11 // pred_check
          %p220 = pneg %p83
        $region22: #{forward.1} parent=11 // pred_check_branch
          %222 = sbr.rel (%p220) target = $region24
        $region23: #{forward.1} parent=11 // pred_region
          %s224 = ssub.s32 128, 128
          %225 = vsyncadd [#allocation6], %s224
          %s227 = sshll.u32 [#allocation9], 4
          %s228 = int_to_ptr.vmem [resolvable:$true] %s227
          %230 = dma.hbm_to_vmem [thread:$0]  %s2, 128, %s228, [#allocation6]
        $region24: #{forward.1} parent=11 // pred_fallthru
          _
        // Predicated region
        $region25: #{forward.1} parent=11 // pred_check
          %p231 = pneg %p104
        $region26: #{forward.1} parent=11 // pred_check_branch
          %233 = sbr.rel (%p231) target = $region28
        $region27: #{forward.1} parent=11 // pred_region
          %s235 = ssub.s32 2048, 2048
          %236 = vsyncadd [#allocation11], %s235
          %s237 = sshll.u32 [#allocation10], 4
          %s238 = int_to_ptr.vmem [resolvable:$true] %s237
          %243 = dma.hbm_to_vmem [thread:$0]  %s3, 2048, %s238, [#allocation11], 128, 128, 8
        $region28: #{forward.1} parent=11 // pred_fallthru
          _
        // Predicated region
        $region29: #{forward.1} parent=11 // pred_check
          %p244 = pneg %p125
        $region30: #{forward.1} parent=11 // pred_check_branch
          %246 = sbr.rel (%p244) target = $region32
        $region31: #{forward.1} parent=11 // pred_region
          _
        $region32: #{forward.1} parent=11 // pred_fallthru
          _
        // Predicated region
        $region33: #{forward.1} parent=11 // pred_check
          %p247 = pneg %p146
        $region34: #{forward.1} parent=11 // pred_check_branch
          %249 = sbr.rel (%p247) target = $region36
        $region35: #{forward.1} parent=11 // pred_region
          %s251 = ssub.s32 2048, 2048
          %252 = vsyncadd [#allocation11], %s251
          %s253 = sshll.u32 [#allocation12], 4
          %s254 = int_to_ptr.vmem [resolvable:$true] %s253
          %259 = dma.hbm_to_vmem [thread:$0]  %s5, 2048, %s254, [#allocation11], 128, 128, 8
        $region36: #{forward.1} parent=11 // pred_fallthru
          _
        // Predicated region
        $region37: #{forward.1} parent=11 // pred_check
          %p260 = pneg %p167
        $region38: #{forward.1} parent=11 // pred_check_branch
          %262 = sbr.rel (%p260) target = $region40
        $region39: #{forward.1} parent=11 // pred_region
          _
        $region40: #{forward.1} parent=11 // pred_fallthru
          _
      $region12: #{forward.1} parent=5 // pred_fallthru
        _
      %p263 = scmp.lt.s32.totalorder %s20, 8
      // Predicated region
      $region41: #{forward.1} parent=5 // pred_check
        %p264 = pneg %p263
      $region42: #{forward.1} parent=5 // pred_check_branch
        %266 = sbr.rel (%p264) target = $region44
      $region43: #{forward.1} parent=5 // pred_region
        _
      $region44: #{forward.1} parent=5 // pred_fallthru
        _
      %p267 = scmp.le.s32.totalorder 1, %s20
      %p268 = scmp.lt.s32.totalorder %s20, 9
      %p269 = pnand %p267, %p268
      %p270 = pneg %p269
      // Predicated region
      $region45: #{forward.1} parent=5 // pred_check
        _
      $region46: #{forward.1} parent=5 // pred_check_branch
        %272 = sbr.rel (%p269) target = $region48
      $region47: #{forward.1} parent=5 // pred_region
        %s273 = ssub.s32 %s20, 1
        // Predicated region
        $region49: #{forward.1} parent=47 // pred_check
          %p274 = pneg %p41
        $region50: #{forward.1} parent=47 // pred_check_branch
          %276 = sbr.rel (%p274) target = $region52
        $region51: #{forward.1} parent=47 // pred_region
          %277 = dma.done [#allocation8], 16
        $region52: #{forward.1} parent=47 // pred_fallthru
          _
        // Predicated region
        $region53: #{forward.1} parent=47 // pred_check
          %p278 = pneg %p83
        $region54: #{forward.1} parent=47 // pred_check_branch
          %280 = sbr.rel (%p278) target = $region56
        $region55: #{forward.1} parent=47 // pred_region
          %281 = dma.done [#allocation6], 128
        $region56: #{forward.1} parent=47 // pred_fallthru
          _
        // Predicated region
        $region57: #{forward.1} parent=47 // pred_check
          %p282 = pneg %p104
        $region58: #{forward.1} parent=47 // pred_check_branch
          %284 = sbr.rel (%p282) target = $region60
        $region59: #{forward.1} parent=47 // pred_region
          %285 = dma.done [#allocation11], 2048
        $region60: #{forward.1} parent=47 // pred_fallthru
          _
        // Predicated region
        $region61: #{forward.1} parent=47 // pred_check
          %p286 = pneg %p146
        $region62: #{forward.1} parent=47 // pred_check_branch
          %288 = sbr.rel (%p286) target = $region64
        $region63: #{forward.1} parent=47 // pred_region
          %289 = dma.done [#allocation11], 2048
        $region64: #{forward.1} parent=47 // pred_fallthru
          _
        %290 = sfence
        %p291 = pneg %p41
        %p292 = pneg %p38
        %p293 = pneg %p62
        %p294 = pneg %p59
        %p295 = pneg %p83
        %p296 = pneg %p80
        %p297 = pneg %p104
        %p298 = pneg %p101
        %p299 = pneg %p125
        %p300 = pneg %p122
        %p301 = pneg %p146
        %p302 = pneg %p143
        %p303 = pneg %p167
        %p304 = pneg %p164
        %p305 = pneg %p193
        %p306 = pneg %p190
        %s307 = sand.u32 %s180, 1
        %s308 = scalar_lea.sflag [#allocation7], %s307
        %s309 = sand.u32 %s180, 1
        %s310 = smul.addr %s309, 8
        %s311 = scalar_lea.vmem [#allocation13], %s310
        %s312 = sld [smem:[#allocation4]]
        %p313 = scmp.eq.s32.totalorder %s25, 0
        // Predicated region
        $region65: #{forward.1} parent=47 // pred_check
          %p314 = pneg %p313
        $region66: #{forward.1} parent=47 // pred_check_branch
          %316 = sbr.rel (%p314) target = $region68
        $region67: #{forward.1} parent=47 // pred_region
          %v317 = vld [vmem:[#allocation9] sm:$0xff]
          %v318 = vld [vmem:[#allocation10] sm:$0xff]
          %v319 = vld [vmem:[#allocation10 + $0x8] sm:$0xff]
          %v320 = vld [vmem:[#allocation10 + $0x10] sm:$0xff]
          %v321 = vld [vmem:[#allocation10 + $0x18] sm:$0xff]
          %v322 = vld [vmem:[#allocation10 + $0x20] sm:$0xff]
          %v323 = vld [vmem:[#allocation10 + $0x28] sm:$0xff]
          %v324 = vld [vmem:[#allocation10 + $0x30] sm:$0xff]
          %v325 = vld [vmem:[#allocation10 + $0x38] sm:$0xff]
          %v326 = vld [vmem:[#allocation10 + $0x40] sm:$0xff]
          %v327 = vld [vmem:[#allocation10 + $0x48] sm:$0xff]
          %v328 = vld [vmem:[#allocation10 + $0x50] sm:$0xff]
          %v329 = vld [vmem:[#allocation10 + $0x58] sm:$0xff]
          %v330 = vld [vmem:[#allocation10 + $0x60] sm:$0xff]
          %v331 = vld [vmem:[#allocation10 + $0x68] sm:$0xff]
          %v332 = vld [vmem:[#allocation10 + $0x70] sm:$0xff]
          %v333 = vld [vmem:[#allocation10 + $0x78] sm:$0xff]
          %v334 = vld [vmem:[%s4] sm:$0x1]
          %v336 = vlaneseq
          %v337 = vshrl.u32 %v336, 7
          %v338 = vsub.s32 0, %v337
          %v339 = vrot.slane %v334, %v338
          %341 = vmatprep.subr.mxu0 0.0
          %342 = vmatpush1.msra.mxu0 %v318
          %343 = vmatprep.subr.mxu0 0.0
          %344 = vmatpush1.msra.mxu0 %v319
          %345 = vmatprep.subr.mxu0 0.0
          %346 = vmatpush1.msra.mxu0 %v320
          %347 = vmatprep.subr.mxu0 0.0
          %348 = vmatpush1.msra.mxu0 %v321
          %349 = vmatprep.subr.mxu0 0.0
          %350 = vmatpush1.msra.mxu0 %v322
          %351 = vmatprep.subr.mxu0 0.0
          %352 = vmatpush1.msra.mxu0 %v323
          %353 = vmatprep.subr.mxu0 0.0
          %354 = vmatpush1.msra.mxu0 %v324
          %355 = vmatprep.subr.mxu0 0.0
          %356 = vmatpush1.msra.mxu0 %v325
          %357 = vmatprep.subr.mxu0 0.0
          %358 = vmatpush1.msra.mxu0 %v326
          %359 = vmatprep.subr.mxu0 0.0
          %360 = vmatpush1.msra.mxu0 %v327
          %361 = vmatprep.subr.mxu0 0.0
          %362 = vmatpush1.msra.mxu0 %v328
          %363 = vmatprep.subr.mxu0 0.0
          %364 = vmatpush1.msra.mxu0 %v329
          %365 = vmatprep.subr.mxu0 0.0
          %366 = vmatpush1.msra.mxu0 %v330
          %367 = vmatprep.subr.mxu0 0.0
          %368 = vmatpush1.msra.mxu0 %v331
          %369 = vmatprep.subr.mxu0 0.0
          %370 = vmatpush1.msra.mxu0 %v332
          %371 = vmatprep.subr.mxu0 0.0
          %372 = vmatpush1.msra.mxu0 %v333
          %373 = vmatprep.subr.mxu0 0.0
          %374 = vmatpush1.msra.mxu0 0.0
          %375 = vmatprep.subr.mxu0 0.0
          %376 = vmatpush1.msra.mxu0 0.0
          %377 = vmatprep.subr.mxu0 0.0
          %378 = vmatpush1.msra.mxu0 0.0
          %379 = vmatprep.subr.mxu0 0.0
          %380 = vmatpush1.msra.mxu0 0.0
          %381 = vmatprep.subr.mxu0 0.0
          %382 = vmatpush1.msra.mxu0 0.0
          %383 = vmatprep.subr.mxu0 0.0
          %384 = vmatpush1.msra.mxu0 0.0
          %385 = vmatprep.subr.mxu0 0.0
          %386 = vmatpush1.msra.mxu0 0.0
          %387 = vmatprep.subr.mxu0 0.0
          %388 = vmatpush1.msra.mxu0 0.0
          %389 = vmatprep.subr.mxu0 0.0
          %390 = vmatpush1.msra.mxu0 0.0
          %391 = vmatprep.subr.mxu0 0.0
          %392 = vmatpush1.msra.mxu0 0.0
          %393 = vmatprep.subr.mxu0 0.0
          %394 = vmatpush1.msra.mxu0 0.0
          %395 = vmatprep.subr.mxu0 0.0
          %396 = vmatpush1.msra.mxu0 0.0
          %397 = vmatprep.subr.mxu0 0.0
          %398 = vmatpush1.msra.mxu0 0.0
          %399 = vmatprep.subr.mxu0 0.0
          %400 = vmatpush1.msra.mxu0 0.0
          %401 = vmatprep.subr.mxu0 0.0
          %402 = vmatpush1.msra.mxu0 0.0
          %403 = vmatprep.subr.mxu0 0.0
          %404 = vmatpush1.msra.mxu0 0.0
          %405 = vmatprep.mubr.f32.mxu0 0.0
          %406 = vmatmul.mubr.f32.gmra.mrb[0].mxu0 %v317
          %v407 = vpop.f32.mrb[0].mxu0
          %v408 = vadd.f32 %v339, %v407
          %v409 = vpop.f32.mrb[0].mxu0
          %410 = vdwg.mxu0
          %v411 = vld [vmem:[#allocation12] sm:$0xff]
          %v412 = vld [vmem:[#allocation12 + $0x8] sm:$0xff]
          %v413 = vld [vmem:[#allocation12 + $0x10] sm:$0xff]
          %v414 = vld [vmem:[#allocation12 + $0x18] sm:$0xff]
          %v415 = vld [vmem:[#allocation12 + $0x20] sm:$0xff]
          %v416 = vld [vmem:[#allocation12 + $0x28] sm:$0xff]
          %v417 = vld [vmem:[#allocation12 + $0x30] sm:$0xff]
          %v418 = vld [vmem:[#allocation12 + $0x38] sm:$0xff]
          %v419 = vld [vmem:[#allocation12 + $0x40] sm:$0xff]
          %v420 = vld [vmem:[#allocation12 + $0x48] sm:$0xff]
          %v421 = vld [vmem:[#allocation12 + $0x50] sm:$0xff]
          %v422 = vld [vmem:[#allocation12 + $0x58] sm:$0xff]
          %v423 = vld [vmem:[#allocation12 + $0x60] sm:$0xff]
          %v424 = vld [vmem:[#allocation12 + $0x68] sm:$0xff]
          %v425 = vld [vmem:[#allocation12 + $0x70] sm:$0xff]
          %v426 = vld [vmem:[#allocation12 + $0x78] sm:$0xff]
          %v427 = vld [vmem:[%s6] sm:$0x1]
          %v429 = vlaneseq
          %v430 = vshrl.u32 %v429, 7
          %v431 = vsub.s32 0, %v430
          %v432 = vrot.slane %v427, %v431
          %434 = vmatprep.subr.mxu0 0.0
          %435 = vmatpush1.msra.mxu0 %v411
          %436 = vmatprep.subr.mxu0 0.0
          %437 = vmatpush1.msra.mxu0 %v412
          %438 = vmatprep.subr.mxu0 0.0
          %439 = vmatpush1.msra.mxu0 %v413
          %440 = vmatprep.subr.mxu0 0.0
          %441 = vmatpush1.msra.mxu0 %v414
          %442 = vmatprep.subr.mxu0 0.0
          %443 = vmatpush1.msra.mxu0 %v415
          %444 = vmatprep.subr.mxu0 0.0
          %445 = vmatpush1.msra.mxu0 %v416
          %446 = vmatprep.subr.mxu0 0.0
          %447 = vmatpush1.msra.mxu0 %v417
          %448 = vmatprep.subr.mxu0 0.0
          %449 = vmatpush1.msra.mxu0 %v418
          %450 = vmatprep.subr.mxu0 0.0
          %451 = vmatpush1.msra.mxu0 %v419
          %452 = vmatprep.subr.mxu0 0.0
          %453 = vmatpush1.msra.mxu0 %v420
          %454 = vmatprep.subr.mxu0 0.0
          %455 = vmatpush1.msra.mxu0 %v421
          %456 = vmatprep.subr.mxu0 0.0
          %457 = vmatpush1.msra.mxu0 %v422
          %458 = vmatprep.subr.mxu0 0.0
          %459 = vmatpush1.msra.mxu0 %v423
          %460 = vmatprep.subr.mxu0 0.0
          %461 = vmatpush1.msra.mxu0 %v424
          %462 = vmatprep.subr.mxu0 0.0
          %463 = vmatpush1.msra.mxu0 %v425
          %464 = vmatprep.subr.mxu0 0.0
          %465 = vmatpush1.msra.mxu0 %v426
          %466 = vmatprep.subr.mxu0 0.0
          %467 = vmatpush1.msra.mxu0 0.0
          %468 = vmatprep.subr.mxu0 0.0
          %469 = vmatpush1.msra.mxu0 0.0
          %470 = vmatprep.subr.mxu0 0.0
          %471 = vmatpush1.msra.mxu0 0.0
          %472 = vmatprep.subr.mxu0 0.0
          %473 = vmatpush1.msra.mxu0 0.0
          %474 = vmatprep.subr.mxu0 0.0
          %475 = vmatpush1.msra.mxu0 0.0
          %476 = vmatprep.subr.mxu0 0.0
          %477 = vmatpush1.msra.mxu0 0.0
          %478 = vmatprep.subr.mxu0 0.0
          %479 = vmatpush1.msra.mxu0 0.0
          %480 = vmatprep.subr.mxu0 0.0
          %481 = vmatpush1.msra.mxu0 0.0
          %482 = vmatprep.subr.mxu0 0.0
          %483 = vmatpush1.msra.mxu0 0.0
          %484 = vmatprep.subr.mxu0 0.0
          %485 = vmatpush1.msra.mxu0 0.0
          %486 = vmatprep.subr.mxu0 0.0
          %487 = vmatpush1.msra.mxu0 0.0
          %488 = vmatprep.subr.mxu0 0.0
          %489 = vmatpush1.msra.mxu0 0.0
          %490 = vmatprep.subr.mxu0 0.0
          %491 = vmatpush1.msra.mxu0 0.0
          %492 = vmatprep.subr.mxu0 0.0
          %493 = vmatpush1.msra.mxu0 0.0
          %494 = vmatprep.subr.mxu0 0.0
          %495 = vmatpush1.msra.mxu0 0.0
          %496 = vmatprep.subr.mxu0 0.0
          %497 = vmatpush1.msra.mxu0 0.0
          %498 = vmatprep.mubr.f32.mxu0 0.0
          %499 = vmatmul.mubr.f32.gmra.mrb[0].mxu0 %v408
          %v500 = vpop.f32.mrb[0].mxu0
          %v501 = vadd.f32 %v432, %v500
          %v502 = vpop.f32.mrb[0].mxu0
          %503 = vdwg.mxu0
          %504 = vst [vmem:[#allocation3] sm:$0xff] %v501
          %505 = vst [vmem:[#allocation2] sm:$0xff] %v317
          %506 = vst [vmem:[%s311] sm:$0xff] %v317
        $region68: #{forward.1} parent=47 // pred_fallthru
          _
        %p507 = scmp.gt.s32.totalorder %s25, 0
        // Predicated region
        $region69: #{forward.1} parent=47 // pred_check
          %p508 = pneg %p507
        $region70: #{forward.1} parent=47 // pred_check_branch
          %510 = sbr.rel (%p508) target = $region72
        $region71: #{forward.1} parent=47 // pred_region
          %v511 = vld [vmem:[#allocation3] sm:$0xff]
          %s512 = ssub.s32 %s25, 1
          %s513 = sld [smem:[#allocation5 + %s512]]
          %s514 = sld [smem:[#allocation5 + %s25]]
          %s515 = ssub.f32 %s514, %s513
          %v516 = vrcp.pop 4.0
          %s517 = vtos %v516
          %s518 = smul.f32 %s515, %s517
          %v519 = vld [vmem:[#allocation2] sm:$0xff]
          %v520 = vmul.f32 %v519, %v511
          %521 = vadd.xlane.f32.xlu0 %v520
          %v522 = vpop.xlane.xlu0 %521
          %v523 = vsub.f32 %v511, %v522
          %v524 = vmul.f32 %v519, %v523
          %v525 = vstv %s312
          %v526 = vmul.f32 %v525, %v524
          %s527 = smul.f32 %s518, 0.5
          %v528 = vstv %s527
          %v529 = vmul.f32 %v528, %v526
          %v530 = vadd.f32 %v519, %v529
          %v531 = vmul.f32 %v530, %v511
          %532 = vadd.xlane.f32.xlu0 %v531
          %v533 = vpop.xlane.xlu0 %532
          %v534 = vsub.f32 %v511, %v533
          %v535 = vmul.f32 %v530, %v534
          %v536 = vmul.f32 %v525, %v535
          %v537 = vmul.f32 %v528, %v536
          %v538 = vadd.f32 %v519, %v537
          %v539 = vmul.f32 %v538, %v511
          %540 = vadd.xlane.f32.xlu0 %v539
          %v541 = vpop.xlane.xlu0 %540
          %v542 = vsub.f32 %v511, %v541
          %v543 = vmul.f32 %v538, %v542
          %v544 = vmul.f32 %v525, %v543
          %v545 = vstv %s518
          %v546 = vmul.f32 %v545, %v544
          %v547 = vadd.f32 %v519, %v546
          %v548 = vmul.f32 %v547, %v511
          %549 = vadd.xlane.f32.xlu0 %v548
          %v550 = vpop.xlane.xlu0 %549
          %v551 = vsub.f32 %v511, %v550
          %v552 = vmul.f32 %v547, %v551
          %v553 = vmul.f32 %v525, %v552
          %v554 = vrcp.pop 6.0
          %s555 = vtos %v554
          %s556 = smul.f32 %s518, %s555
          %v557 = vmul.f32 %v536, 2.0
          %v558 = vadd.f32 %v526, %v557
          %v559 = vmul.f32 %v544, 2.0
          %v560 = vadd.f32 %v558, %v559
          %v561 = vadd.f32 %v560, %v553
          %v562 = vstv %s556
          %v563 = vmul.f32 %v562, %v561
          %v564 = vadd.f32 %v519, %v563
          %v565 = vmul.f32 %v564, %v511
          %566 = vadd.xlane.f32.xlu0 %v565
          %v567 = vpop.xlane.xlu0 %566
          %v568 = vsub.f32 %v511, %v567
          %v569 = vmul.f32 %v564, %v568
          %v570 = vmul.f32 %v525, %v569
          %v571 = vmul.f32 %v528, %v570
          %v572 = vadd.f32 %v564, %v571
          %v573 = vmul.f32 %v572, %v511
          %574 = vadd.xlane.f32.xlu0 %v573
          %v575 = vpop.xlane.xlu0 %574
          %v576 = vsub.f32 %v511, %v575
          %v577 = vmul.f32 %v572, %v576
          %v578 = vmul.f32 %v525, %v577
          %v579 = vmul.f32 %v528, %v578
          %v580 = vadd.f32 %v564, %v579
          %v581 = vmul.f32 %v580, %v511
          %582 = vadd.xlane.f32.xlu0 %v581
          %v583 = vpop.xlane.xlu0 %582
          %v584 = vsub.f32 %v511, %v583
          %v585 = vmul.f32 %v580, %v584
          %v586 = vmul.f32 %v525, %v585
          %v587 = vmul.f32 %v545, %v586
          %v588 = vadd.f32 %v564, %v587
          %v589 = vmul.f32 %v588, %v511
          %590 = vadd.xlane.f32.xlu0 %v589
          %v591 = vpop.xlane.xlu0 %590
          %v592 = vsub.f32 %v511, %v591
          %v593 = vmul.f32 %v588, %v592
          %v594 = vmul.f32 %v525, %v593
          %v595 = vmul.f32 %v578, 2.0
          %v596 = vadd.f32 %v570, %v595
          %v597 = vmul.f32 %v586, 2.0
          %v598 = vadd.f32 %v596, %v597
          %v599 = vadd.f32 %v598, %v594
          %v600 = vmul.f32 %v562, %v599
          %v601 = vadd.f32 %v564, %v600
          %v602 = vmul.f32 %v601, %v511
          %603 = vadd.xlane.f32.xlu0 %v602
          %v604 = vpop.xlane.xlu0 %603
          %v605 = vsub.f32 %v511, %v604
          %v606 = vmul.f32 %v601, %v605
          %v607 = vmul.f32 %v525, %v606
          %v608 = vmul.f32 %v528, %v607
          %v609 = vadd.f32 %v601, %v608
          %v610 = vmul.f32 %v609, %v511
          %611 = vadd.xlane.f32.xlu0 %v610
          %v612 = vpop.xlane.xlu0 %611
          %v613 = vsub.f32 %v511, %v612
          %v614 = vmul.f32 %v609, %v613
          %v615 = vmul.f32 %v525, %v614
          %v616 = vmul.f32 %v528, %v615
          %v617 = vadd.f32 %v601, %v616
          %v618 = vmul.f32 %v617, %v511
          %619 = vadd.xlane.f32.xlu0 %v618
          %v620 = vpop.xlane.xlu0 %619
          %v621 = vsub.f32 %v511, %v620
          %v622 = vmul.f32 %v617, %v621
          %v623 = vmul.f32 %v525, %v622
          %v624 = vmul.f32 %v545, %v623
          %v625 = vadd.f32 %v601, %v624
          %v626 = vmul.f32 %v625, %v511
          %627 = vadd.xlane.f32.xlu0 %v626
          %v628 = vpop.xlane.xlu0 %627
          %v629 = vsub.f32 %v511, %v628
          %v630 = vmul.f32 %v625, %v629
          %v631 = vmul.f32 %v525, %v630
          %v632 = vmul.f32 %v615, 2.0
          %v633 = vadd.f32 %v607, %v632
          %v634 = vmul.f32 %v623, 2.0
          %v635 = vadd.f32 %v633, %v634
          %v636 = vadd.f32 %v635, %v631
          %v637 = vmul.f32 %v562, %v636
          %v638 = vadd.f32 %v601, %v637
          %v639 = vmul.f32 %v638, %v511
          %640 = vadd.xlane.f32.xlu0 %v639
          %v641 = vpop.xlane.xlu0 %640
          %v642 = vsub.f32 %v511, %v641
          %v643 = vmul.f32 %v638, %v642
          %v644 = vmul.f32 %v525, %v643
          %v645 = vmul.f32 %v528, %v644
          %v646 = vadd.f32 %v638, %v645
          %v647 = vmul.f32 %v646, %v511
          %648 = vadd.xlane.f32.xlu0 %v647
          %v649 = vpop.xlane.xlu0 %648
          %v650 = vsub.f32 %v511, %v649
          %v651 = vmul.f32 %v646, %v650
          %v652 = vmul.f32 %v525, %v651
          %v653 = vmul.f32 %v528, %v652
          %v654 = vadd.f32 %v638, %v653
          %v655 = vmul.f32 %v654, %v511
          %656 = vadd.xlane.f32.xlu0 %v655
          %v657 = vpop.xlane.xlu0 %656
          %v658 = vsub.f32 %v511, %v657
          %v659 = vmul.f32 %v654, %v658
          %v660 = vmul.f32 %v525, %v659
          %v661 = vmul.f32 %v545, %v660
          %v662 = vadd.f32 %v638, %v661
          %v663 = vmul.f32 %v662, %v511
          %664 = vadd.xlane.f32.xlu0 %v663
          %v665 = vpop.xlane.xlu0 %664
          %v666 = vsub.f32 %v511, %v665
          %v667 = vmul.f32 %v662, %v666
          %v668 = vmul.f32 %v525, %v667
          %v669 = vmul.f32 %v652, 2.0
          %v670 = vadd.f32 %v644, %v669
          %v671 = vmul.f32 %v660, 2.0
          %v672 = vadd.f32 %v670, %v671
          %v673 = vadd.f32 %v672, %v668
          %v674 = vmul.f32 %v562, %v673
          %v675 = vadd.f32 %v638, %v674
          %676 = vst [vmem:[#allocation2] sm:$0xff] %v675
          %677 = vst [vmem:[%s311] sm:$0xff] %v675
        $region72: #{forward.1} parent=47 // pred_fallthru
          _
        %s678 = sand.u32 %s180, 1
        %s679 = scalar_lea.sflag [#allocation7], %s678
        %s680 = sand.u32 %s180, 1
        %s681 = smul.addr %s680, 8
        %s682 = scalar_lea.vmem [#allocation13], %s681
        // Predicated region
        $region73: #{forward.1} parent=47 // pred_check
          %p683 = pneg %p190
        $region74: #{forward.1} parent=47 // pred_check_branch
          %685 = sbr.rel (%p683) target = $region76
        $region75: #{forward.1} parent=47 // pred_region
          %s687 = ssub.s32 128, 128
          %688 = vsyncadd %s679, %s687
          %s689 = smul.addr %s25, 128
          %s690 = scalar_lea.hbm %s7, %s689
          %s692 = sshll.u32 %s682, 4
          %s693 = int_to_ptr.vmem [resolvable:$true] %s692
          %695 = dma.vmem_to_hbm [thread:$0]  %s693, 128, %s690, %s679
        $region76: #{forward.1} parent=47 // pred_fallthru
          _
      $region48: #{forward.1} parent=5 // pred_fallthru
        _
      %p696 = scmp.le.s32.totalorder 2, %s20
      // Predicated region
      $region77: #{forward.1} parent=5 // pred_check
        %p697 = pneg %p696
      $region78: #{forward.1} parent=5 // pred_check_branch
        %699 = sbr.rel (%p697) target = $region80
      $region79: #{forward.1} parent=5 // pred_region
        %s700 = ssub.s32 %s20, 2
        // Predicated region
        $region81: #{forward.1} parent=79 // pred_check
          %p701 = pneg %p196
        $region82: #{forward.1} parent=79 // pred_check_branch
          %703 = sbr.rel (%p701) target = $region84
        $region83: #{forward.1} parent=79 // pred_region
          %s704 = sand.u32 %s181, 1
          %s705 = scalar_lea.sflag [#allocation7], %s704
          %s706 = sand.u32 %s181, 1
          %s707 = smul.addr %s706, 8
          %s708 = scalar_lea.vmem [#allocation13], %s707
          %709 = dma.done %s705, 128
        $region84: #{forward.1} parent=79 // pred_fallthru
          _
      $region80: #{forward.1} parent=5 // pred_fallthru
        _
    $region6: #{forward.1} parent=1 // loop_footer
      %s24 = sadd.s32 1, %s20
    $region7: #{forward.1} parent=1 // loop_footer_branch
      %19 = sbr.rel target = $region3
    $region8: #{forward.1} parent=1 // loop_exit
      _
    %710 = vsyncpa [#allocation6], 1
    %s711 = scalar_lea.sflag [#allocation6], 1
    %712 = vsyncpa %s711, 1
    %713 = vsyncpa [#allocation11], 1
    %714 = vsyncpa [#allocation7], 1
    %s715 = scalar_lea.sflag [#allocation7], 1
    %716 = vsyncpa %s715, 1
    %717 = vsyncpa [#allocation8], 1
    %s718 = scalar_lea.sflag [#allocation8], 1
    %719 = vsyncpa %s718, 1

</llo_original>
